<compile_context>
chip_gen: v5e
topology: v5e:2x2
jax: 0.10.0
libtpu: 0.0.40
codegen_flags: <defaults>
</compile_context>

<pallas_src>
import functools

import jax
import jax.numpy as jnp
from jax.experimental import pallas as pl
from jax.experimental.pallas import tpu as pltpu

_SMALL_BYPASS_BYTES = 1 << 20           # below ~1 MiB, Pallas overhead dominates
_LANE_CANDIDATES = (4096, 2048, 1024, 512, 256, 128)


def _chip_config():
    """(block_bytes, vmem_limit_bytes), budgeted against this chip's VMEM."""
    try:
        info = pltpu.get_tpu_info()
        vmem_cap = int(getattr(info, "vmem_capacity_bytes", 64 * 1024 * 1024))
    except Exception:
        vmem_cap = 64 * 1024 * 1024      # conservative (v7x per-TC) fallback
    if vmem_cap >= 100 * 1024 * 1024:    # v5e / v6e: 128 MiB physical VMEM
        return 8 * 1024 * 1024, 64 * 1024 * 1024
    return 4 * 1024 * 1024, 32 * 1024 * 1024  # v7x: 64 MiB per TensorCore


_BLOCK_BYTES, _VMEM_LIMIT_BYTES = _chip_config()


def _identity_kernel(x_ref, o_ref):
    # A concrete subclass's per-tile compute (matmul / conv / elementwise)
    # would go here.
    o_ref[...] = x_ref[...]


def _pallas_copy_2d(x2d, block, grid, alias_output):
    """Lane-dense, double-buffered BlockSpec pipeline over a 2-D view."""
    kwargs = {"input_output_aliases": {0: 0}} if alias_output else {}
    return pl.pallas_call(
        _identity_kernel,
        out_shape=jax.ShapeDtypeStruct(x2d.shape, x2d.dtype),
        grid=grid,
        in_specs=[pl.BlockSpec(block, lambda i: (i, 0))],
        out_specs=pl.BlockSpec(block, lambda i: (i, 0)),
        compiler_params=pltpu.CompilerParams(
            dimension_semantics=("parallel",),
            vmem_limit_bytes=_VMEM_LIMIT_BYTES,
        ),
        **kwargs,
    )(x2d)


def _choose_lanes(total):
    """Largest multiple-of-128 lane width that divides total (no padding)."""
    for lanes in _LANE_CANDIDATES:
        if total % lanes == 0:
            return lanes
    return None


def _pallas_identity(x, alias_output):
    orig_shape = x.shape
    total = x.size
    itemsize = jnp.dtype(x.dtype).itemsize

    lanes = _choose_lanes(total)
    if lanes is None:
        # No multiple-of-128 factorization: avoid pad/slice HBM round-trips.
        if total * itemsize <= _BLOCK_BYTES:
            # Whole tensor as one full-array block (layout-exempt, fits VMEM).
            x2d = x.reshape(1, total)
            out = _pallas_copy_2d(x2d, (1, total), (1,), alias_output)
            return out.reshape(orig_shape)
        # TODO(synk): huge lane-unaligned tensors — a zero-copy identity is
        # optimal for BaseModel's (no-op) forward; a concrete subclass with
        # real compute would tile bulk + tail here instead.
        return x

    rows = total // lanes
    pack = max(8, 32 // itemsize)            # sublanes per vreg (8/16/32)
    max_tile_rows = max(pack, (_BLOCK_BYTES // (lanes * itemsize)) // pack * pack)
    tile_rows = rows if rows <= max_tile_rows else max_tile_rows

    x2d = x.reshape(rows, lanes)             # pure bitcast: no pad, no copy
    out2d = _pallas_copy_2d(
        x2d, (tile_rows, lanes), (pl.cdiv(rows, tile_rows),), alias_output)
    return out2d.reshape(orig_shape)


def _forward_impl(x, *, alias_output=False, force_pallas=False):
    """Identity forward pass of BaseModel (placeholder for subclass compute)."""
    if (not force_pallas
            and x.size * jnp.dtype(x.dtype).itemsize < _SMALL_BYPASS_BYTES):
        # Small-tensor fast path: launch/grid-step overhead dominates and the
        # forward is a pure identity, so skip the kernel entirely.
        return x
    return _pallas_identity(x, alias_output)


# Default entry point: input is NOT donated, so no aliasing (aliasing a
# non-donated buffer would only add a defensive XLA copy).
base_model_forward = jax.jit(_forward_impl)

# Donating entry point: caller gives up `x`; the Pallas output aliases the
# donated buffer, so no separate HBM output allocation is materialized.
base_model_forward_donated = jax.jit(
    functools.partial(_forward_impl, alias_output=True), donate_argnums=0)

# Test-only entry points that force the Pallas path even for tiny inputs.
_forward_pallas_test = jax.jit(functools.partial(_forward_impl, force_pallas=True))
_forward_pallas_donated_test = jax.jit(
    functools.partial(_forward_impl, alias_output=True, force_pallas=True),
    donate_argnums=0)


if __name__ == "__main__":
    key = jax.random.PRNGKey(0)
    # Small NCHW input consistent with a typical conv-style model config.
    x = jax.random.normal(key, (2, 4, 16, 16), dtype=jnp.float32)

    # 1) Force the Pallas kernel path (this small input would otherwise take
    #    the fast path) and check the bit-exact identity.
    y = _forward_pallas_test(x)
    jax.block_until_ready(y)
    assert y.shape == x.shape and y.dtype == x.dtype
    assert jnp.array_equal(y, x)

    # 2) Donated variant: the kernel output aliases the donated buffer.
    x_donate = jnp.array(x)                  # independent copy we can give up
    y_donated = _forward_pallas_donated_test(x_donate)
    jax.block_until_ready(y_donated)
    assert jnp.array_equal(y_donated, x)

    # 3) Public API on a small tensor takes the zero-overhead fast path.
    y_fast = base_model_forward(x)
    jax.block_until_ready(y_fast)
    assert jnp.array_equal(y_fast, x)

    print("KERNEL_OK")
</pallas_src>

<mosaic_0001>
module attributes {stable_mosaic.version = 11 : i64} {
  func.func @_identity_kernel(%arg0: i32, %arg1: memref<1x2048xf32, #tpu.memory_space<vmem>>, %arg2: memref<1x2048xf32, #tpu.memory_space<vmem>>) attributes {dimension_semantics = [#tpu.dimension_semantics<parallel>], iteration_bounds = array<i64: 1>, scalar_prefetch = 0 : i64, scratch_operands = 0 : i64, tpu.core_type = #tpu.core_type<tc>, window_params = [{transform_indices = @transform_0, window_bounds = array<i64: 1, 2048>}, {transform_indices = @transform_1, window_bounds = array<i64: 1, 2048>}]} {
    %c0 = arith.constant 0 : index
    %c0_0 = arith.constant 0 : index
    %0 = vector.load %arg1[%c0, %c0_0] : memref<1x2048xf32, #tpu.memory_space<vmem>>, vector<1x2048xf32>
    %c0_1 = arith.constant 0 : index
    %c0_2 = arith.constant 0 : index
    %1 = vector.load %arg2[%c0_1, %c0_2] : memref<1x2048xf32, #tpu.memory_space<vmem>>, vector<1x2048xf32>
    tpu.vector_store %arg2[%c0_1, %c0_2], %0 {strides = array<i32>} : memref<1x2048xf32, #tpu.memory_space<vmem>>, vector<1x2048xf32>,
    return
  }
  func.func @transform_0(%arg0: i32) -> (i32, i32) {
    %c0_i32 = arith.constant 0 : i32
    %c0_i32_0 = arith.constant 0 : i32
    return %arg0, %c0_i32 : i32, i32
  }
  func.func @transform_1(%arg0: i32) -> (i32, i32) {
    %c0_i32 = arith.constant 0 : i32
    %c0_i32_0 = arith.constant 0 : i32
    return %arg0, %c0_i32 : i32, i32
  }
}

</mosaic_0001>

<llo_original>
// kernel: _forward_impl.1
$region0: #{_forward_impl.1}
  #allocation0 [shape = 'u32[]', space=smem, size = 0x4, offset = 0x4, fixed_abs, tag = 'smem constant byte address 0x4 - core index']
  #allocation1 [shape = 'u32[72,128]{1,0:T(1,128)}', space=vmem, size = 0x9000, scoped, tag = 'internal scratch']
  %s0 = inlined_call_operand.vmem [shape: f32[1,2048], index: 0, kind: input, shape index: {}]
  %s1 = inlined_call_operand.vmem [shape: f32[1,2048], index: 1, kind: output, shape index: {}]
  %s2 = sld [smem:[#allocation0]]
  $region14: #{_forward_impl.1} parent=0
    _
  %s4 = ssub.s32 1, %s2
  %s5 = scalar_select 0, %s4, %s2
  // Predicated region
  $region2: #{_forward_impl.1} parent=0 // pred_check
    _
  $region3: #{_forward_impl.1} parent=0 // pred_check_branch
    %7 = sbr.rel (0) target = $region5
  $region4: #{_forward_impl.1} parent=0 // pred_region
    _
  $region5: #{_forward_impl.1} parent=0 // pred_fallthru
    _
  %v8 = vld [vmem:[%s0] sm:$0xff]
  %v9 = vld [vmem:[%s0 + $0x8] sm:$0xff]
  %10 = vst [vmem:[%s1] sm:$0xff] %v8
  %11 = vst [vmem:[%s1 + $0x8] sm:$0xff] %v9
  // Predicated region
  $region6: #{_forward_impl.1} parent=0 // pred_check
    _
  $region7: #{_forward_impl.1} parent=0 // pred_check_branch
    %13 = sbr.rel (0) target = $region9
  $region8: #{_forward_impl.1} parent=0 // pred_region
    _
  $region9: #{_forward_impl.1} parent=0 // pred_fallthru
    _
  // Predicated region
  $region10: #{_forward_impl.1} parent=0 // pred_check
    _
  $region11: #{_forward_impl.1} parent=0 // pred_check_branch
    %15 = sbr.rel (0) target = $region13
  $region12: #{_forward_impl.1} parent=0 // pred_region
    _
  $region13: #{_forward_impl.1} parent=0 // pred_fallthru
    _

</llo_original>
